<compile_context>
chip_gen: v6e
topology: v6e:2x2x1
jax: 0.10.0
libtpu: 0.0.40
codegen_flags: <defaults>
</compile_context>

<pallas_src>
import jax
import jax.numpy as jnp
from jax.experimental import pallas as pl
from jax.experimental.pallas import tpu as pltpu

TOP_N = 2
REG_WEIGHT = 0.05


# ----------------------------------------------------------------------------
# In-kernel helpers
# ----------------------------------------------------------------------------
def _expand_instance_cols(vals_t, lane_ids, n_samples, n_inst, width):
    """(R, n_inst) -> (R, width) with out[r, b*n + i] = vals_t[r, b] (exact)."""
    if n_inst == 1:
        return jnp.broadcast_to(vals_t, (vals_t.shape[0], width))
    out = jnp.zeros((vals_t.shape[0], width), vals_t.dtype)
    for b in range(n_inst):
        in_seg = (lane_ids >= b * n_samples) & (lane_ids < (b + 1) * n_samples)
        out = jnp.where(in_seg, vals_t[:, b:b + 1], out)
    return out


def _segment_sum_lanes(x, n_samples, n_inst, width):
    """(R, width) -> (R, n_inst): sum lanes within each instance segment (MXU)."""
    if n_inst == 1:
        return jnp.sum(x, axis=1, keepdims=True)
    l_ids = jax.lax.broadcasted_iota(jnp.int32, (width, n_inst), 0)
    b_ids = jax.lax.broadcasted_iota(jnp.int32, (width, n_inst), 1)
    seg_ones = ((l_ids >= b_ids * n_samples)
                & (l_ids < (b_ids + 1) * n_samples)).astype(jnp.float32)
    return jnp.dot(x, seg_ones,
                   preferred_element_type=jnp.float32,
                   precision=jax.lax.Precision.HIGHEST)


# ----------------------------------------------------------------------------
# Kernel body.  Layout per block (n_inst instances packed along lanes):
#   rows_ref : (3, W)      row 0/1/2 = y_b[i], length_b[i], event_b[i] at lane b*n+i
#   cols_ref : (2n, Binst) rows 0..n-1 = y_b[j], rows n..2n-1 = length_b[j]
#   rand_ref : (n, W)      rand_b[i, j] stored at [j, b*n + i]   (transposed)
#   out_ref  : (1, Binst)  per-instance scalar loss
# ----------------------------------------------------------------------------
def _cox_sgd_loss_kernel(rows_ref, cols_ref, rand_ref, out_ref):
    n = rand_ref.shape[0]
    width = rand_ref.shape[1]
    n_inst = width // n

    y_i = rows_ref[0:1, :]            # (1, W)
    len_i = rows_ref[1:2, :]          # (1, W)
    evt_i = rows_ref[2:3, :]          # (1, W)
    y_t = cols_ref[0:n, :]            # (n, Binst)
    len_t = cols_ref[n:2 * n, :]      # (n, Binst)
    rand = rand_ref[...]              # (n, W)

    lane_ids = jax.lax.broadcasted_iota(jnp.int32, (1, width), 1)
    row_ids = jax.lax.broadcasted_iota(jnp.int32, (n, width), 0)

    # row_max of score_diff over j is maxy_b - y_b[i], so
    # exp(score_diff - row_max) = exp(y_b[j] - maxy_b): only a (n, Binst) exp.
    maxy_t = jnp.max(y_t, axis=0, keepdims=True)             # (1, Binst)
    eexp_t = jnp.exp(y_t - maxy_t)                            # (n, Binst)

    expanded = _expand_instance_cols(
        jnp.concatenate([len_t, eexp_t, maxy_t], axis=0),
        lane_ids, n, n_inst, width)                           # (2n + 1, W)
    len_j = expanded[0:n, :]
    exp_j = expanded[n:2 * n, :]
    maxy_i = expanded[2 * n:2 * n + 1, :]                     # (1, W)

    # pair_mat[j, b*n+i] = (len_b[j] - len_b[i] > 0) * event_b[i]   (folded mask)
    pair = jnp.where(len_j - len_i > 0.0, evt_i, 0.0)         # (n, W)

    if TOP_N > 0:
        p = pair * (1.0 + rand)
        # (TOP_N + 1)-th largest per (i, b) column via iterative sublane max.
        # Equivalent to the argsort tie-break because positive p values are
        # distinct (continuous f32 rand) and zero ties are killed by pair.
        work = p
        thr = jnp.zeros((1, width), jnp.float32)
        for t in range(TOP_N + 1):
            thr = jnp.max(work, axis=0, keepdims=True)        # (1, W)
            if t < TOP_N:
                work = jnp.where(work == thr, -1.0, work)
        pair = jnp.where(p > thr, pair, 0.0)

    row_sum = jnp.sum(pair, axis=0, keepdims=True)            # (1, W)
    valid = row_sum != 0.0                                    # (1, W)

    # diagonal insertion on valid rows: element with j == i (lane offset == sublane)
    if n & (n - 1) == 0:
        diag = (lane_ids & (n - 1)) == row_ids
    else:
        diag = jnp.zeros((n, width), jnp.bool_)
        for b in range(n_inst):
            diag = diag | (lane_ids == row_ids + b * n)
    pair = jnp.where(diag & valid, 1.0, pair)

    exp_sum = jnp.sum(exp_j * pair, axis=0, keepdims=True)    # (1, W)
    exp_sum = jnp.where(valid, exp_sum, 1.0)                  # guard log(0)
    per_lane = jnp.where(valid, maxy_i - y_i + jnp.log(exp_sum), 0.0)  # (1, W)

    # per-instance segment sums (over i) on the MXU: pair column sums + loss sum
    sums = _segment_sum_lanes(jnp.concatenate([pair, per_lane], axis=0),
                              n, n_inst, width)               # (n + 1, Binst)
    cols_sum = sums[0:n, :]                                   # (n, Binst)
    loss_main = sums[n:n + 1, :]                              # (1, Binst)

    reg = jnp.sum(jnp.abs(cols_sum * y_t), axis=0, keepdims=True)  # (1, Binst)
    out_ref[...] = loss_main + REG_WEIGHT * reg


# ----------------------------------------------------------------------------
# Single-instance wrapper (faithful to CoxSGDLossFn.forward): grid-free.
# ----------------------------------------------------------------------------
@jax.jit
def cox_sgd_loss(y_pred, length, event, rand_mat):
    n = rand_mat.shape[-1]
    y = y_pred.reshape(n).astype(jnp.float32)
    ln = length.reshape(n).astype(jnp.float32)
    ev = event.reshape(n).astype(jnp.float32)

    rows = jnp.stack([y, ln, ev], axis=0)                              # (3, n)
    cols = jnp.concatenate([y.reshape(n, 1), ln.reshape(n, 1)], axis=0)  # (2n, 1)
    randp = rand_mat.astype(jnp.float32).T                             # (n_j, n_i)

    out = pl.pallas_call(
        _cox_sgd_loss_kernel,
        out_shape=jax.ShapeDtypeStruct((1, 1), jnp.float32),
        in_specs=[pl.BlockSpec(memory_space=pltpu.MemorySpace.VMEM)] * 3,
        out_specs=pl.BlockSpec(memory_space=pltpu.MemorySpace.VMEM),
    )(rows, cols, randp)
    return out[0, 0]


# ----------------------------------------------------------------------------
# Batched wrapper: B independent loss instances, Bc instances per grid step,
# lane-packed; grid = B // Bc with megacore-parallel semantics.
# ----------------------------------------------------------------------------
@jax.jit
def cox_sgd_loss_batched(y_pred, length, event, rand_mat):
    B, n = rand_mat.shape[0], rand_mat.shape[-1]
    y = y_pred.reshape(B, n).astype(jnp.float32)
    ln = length.reshape(B, n).astype(jnp.float32)
    ev = event.reshape(B, n).astype(jnp.float32)
    rnd = rand_mat.astype(jnp.float32)

    # instances per grid step: fill the 128-lane vregs, must divide B
    bc = min(B, max(1, 128 // n))
    while B % bc:
        bc -= 1
    c = B // bc
    w = bc * n

    yc = y.reshape(c, bc, n)
    lc = ln.reshape(c, bc, n)
    ec = ev.reshape(c, bc, n)
    rows = jnp.stack([yc.reshape(c, w), lc.reshape(c, w), ec.reshape(c, w)],
                     axis=1)                                              # (c, 3, w)
    cols = jnp.concatenate([jnp.swapaxes(yc, 1, 2), jnp.swapaxes(lc, 1, 2)],
                           axis=1)                                        # (c, 2n, bc)
    # randp[ci, j, b*n + i] = rnd[ci*bc + b, i, j]  (per-instance transpose)
    randp = jnp.transpose(rnd.reshape(c, bc, n, n), (0, 3, 1, 2)).reshape(c, n, w)

    out = pl.pallas_call(
        _cox_sgd_loss_kernel,
        out_shape=jax.ShapeDtypeStruct((c, 1, bc), jnp.float32),
        grid=(c,),
        in_specs=[
            pl.BlockSpec((None, 3, w), lambda i: (i, 0, 0)),
            pl.BlockSpec((None, 2 * n, bc), lambda i: (i, 0, 0)),
            pl.BlockSpec((None, n, w), lambda i: (i, 0, 0)),
        ],
        out_specs=pl.BlockSpec((None, 1, bc), lambda i: (i, 0, 0)),
        compiler_params=pltpu.CompilerParams(
            dimension_semantics=("parallel",)),
    )(rows, cols, randp)
    return out.reshape(B)


# ----------------------------------------------------------------------------
# Pure-JAX reference mirroring the PyTorch forward (same rand matrix)
# ----------------------------------------------------------------------------
def cox_sgd_loss_ref(y_pred, length, event, rand_mat,
                     top_n=TOP_N, reg_w=REG_WEIGHT):
    y = y_pred.reshape(-1).astype(jnp.float32)
    length = length.reshape(-1).astype(jnp.float32)
    event = event.reshape(-1).astype(jnp.float32)
    n = y.shape[0]
    pair_mat = ((length[None, :] - length[:, None]) > 0).astype(jnp.float32) * event[:, None]
    if top_n > 0:
        p = pair_mat * (1.0 + rand_mat)
        thr = jnp.sort(p, axis=1)[:, -(top_n + 1)][:, None]
        pair_mat = pair_mat * (p > thr).astype(jnp.float32)
    valid = pair_mat.sum(1) != 0
    pair_mat = jnp.where(jnp.eye(n, dtype=bool) & valid[:, None], 1.0, pair_mat)
    score_diff = y[None, :] - y[:, None]
    row_max = score_diff.max(1, keepdims=True)
    loss_row = (jnp.exp(score_diff - row_max) * pair_mat).sum(1)
    loss_row = jnp.where(valid, loss_row, 1.0)
    loss = jnp.where(valid, row_max[:, 0] + jnp.log(loss_row), 0.0).sum()
    reg = jnp.abs(pair_mat.sum(0) * y).sum()
    return loss + reg_w * reg


if __name__ == "__main__":
    n = 16   # samples per loss instance
    B = 16   # independent loss instances for the batched path (grid of 2)
    key = jax.random.PRNGKey(0)
    k1, k2, k3, k4, k5, k6, k7, k8 = jax.random.split(key, 8)

    # ---- single instance (module-faithful forward) ----
    y_pred = jax.random.normal(k1, (n, 1), jnp.float32)                            # risk scores
    length = jax.random.uniform(k2, (n,), jnp.float32, minval=1.0, maxval=100.0)   # survival times
    event = (jax.random.uniform(k3, (n,)) > 0.3).astype(jnp.float32)               # censoring indicator
    rand_mat = jax.random.uniform(k4, (n, n), jnp.float32)                         # torch.rand_like stand-in

    out = jax.block_until_ready(cox_sgd_loss(y_pred, length, event, rand_mat))
    ref = cox_sgd_loss_ref(y_pred, length, event, rand_mat)
    assert jnp.allclose(out, ref, rtol=1e-3, atol=1e-3), (float(out), float(ref))

    # ---- batched instances (throughput path, 8 instances per grid step) ----
    yb = jax.random.normal(k5, (B, n), jnp.float32)
    lb = jax.random.uniform(k6, (B, n), jnp.float32, minval=1.0, maxval=100.0)
    eb = (jax.random.uniform(k7, (B, n)) > 0.3).astype(jnp.float32)
    rb = jax.random.uniform(k8, (B, n, n), jnp.float32)

    outb = jax.block_until_ready(cox_sgd_loss_batched(yb, lb, eb, rb))
    refb = jax.vmap(cox_sgd_loss_ref)(yb, lb, eb, rb)
    assert jnp.allclose(outb, refb, rtol=1e-3, atol=1e-3), (outb, refb)

    print("KERNEL_OK")
</pallas_src>

<mosaic_0001>
module attributes {stable_mosaic.version = 11 : i64} {
  func.func @_cox_sgd_loss_kernel(%arg0: memref<3x16xf32, #tpu.memory_space<vmem>>, %arg1: memref<32x1xf32, #tpu.memory_space<vmem>>, %arg2: memref<16x16xf32, #tpu.memory_space<vmem>>, %arg3: memref<1x1xf32, #tpu.memory_space<vmem>>) attributes {dimension_semantics = [], scalar_prefetch = 0 : i64, scratch_operands = 0 : i64, tpu.core_type = #tpu.core_type<tc>} {
    %c0 = arith.constant 0 : index
    %c0_0 = arith.constant 0 : index
    %0 = vector.load %arg0[%c0, %c0_0] : memref<3x16xf32, #tpu.memory_space<vmem>>, vector<1x16xf32>
    %c1 = arith.constant 1 : index
    %c0_1 = arith.constant 0 : index
    %1 = vector.load %arg0[%c1, %c0_1] : memref<3x16xf32, #tpu.memory_space<vmem>>, vector<1x16xf32>
    %c2 = arith.constant 2 : index
    %c0_2 = arith.constant 0 : index
    %2 = vector.load %arg0[%c2, %c0_2] : memref<3x16xf32, #tpu.memory_space<vmem>>, vector<1x16xf32>
    %c0_3 = arith.constant 0 : index
    %c0_4 = arith.constant 0 : index
    %3 = vector.load %arg1[%c0_3, %c0_4] : memref<32x1xf32, #tpu.memory_space<vmem>>, vector<16x1xf32>
    %c16 = arith.constant 16 : index
    %c0_5 = arith.constant 0 : index
    %4 = vector.load %arg1[%c16, %c0_5] : memref<32x1xf32, #tpu.memory_space<vmem>>, vector<16x1xf32>
    %c0_6 = arith.constant 0 : index
    %c0_7 = arith.constant 0 : index
    %5 = vector.load %arg2[%c0_6, %c0_7] : memref<16x16xf32, #tpu.memory_space<vmem>>, vector<16x16xf32>
    %6 = tpu.iota {dimensions = array<i32: 1>} : vector<1x16xi32>
    %7 = tpu.iota {dimensions = array<i32: 0>} : vector<16x16xi32>
    %cst = arith.constant dense<0xFF800000> : vector<1xf32>
    %8 = vector.multi_reduction <maximumf>, %3, %cst [0] : vector<16x1xf32> to vector<1xf32>
    %9 = vector.shape_cast %8 : vector<1xf32> to vector<1x1xf32>
    %10 = vector.broadcast %9 : vector<1x1xf32> to vector<16x1xf32>
    %11 = arith.subf %3, %10 : vector<16x1xf32>
    %12 = math.exp %11 : vector<16x1xf32>
    %13 = tpu.concatenate %4, %12, %9 in 0 : vector<16x1xf32>, vector<16x1xf32>, vector<1x1xf32> -> vector<33x1xf32>
    %14 = vector.shape_cast %13 : vector<33x1xf32> to vector<33x1xf32>
    %15 = vector.broadcast %14 : vector<33x1xf32> to vector<33x16xf32>
    %16 = vector.extract_strided_slice %15 {offsets = [0, 0], sizes = [16, 16], strides = [1, 1]} : vector<33x16xf32> to vector<16x16xf32>
    %17 = vector.extract_strided_slice %15 {offsets = [16, 0], sizes = [16, 16], strides = [1, 1]} : vector<33x16xf32> to vector<16x16xf32>
    %18 = vector.extract_strided_slice %15 {offsets = [32, 0], sizes = [1, 16], strides = [1, 1]} : vector<33x16xf32> to vector<1x16xf32>
    %19 = vector.broadcast %1 : vector<1x16xf32> to vector<16x16xf32>
    %20 = arith.subf %16, %19 : vector<16x16xf32>
    %cst_8 = arith.constant 0.000000e+00 : f32
    %21 = vector.broadcast %cst_8 : f32 to vector<16x16xf32>
    %22 = arith.cmpf ogt, %20, %21 : vector<16x16xf32>
    %cst_9 = arith.constant 0.000000e+00 : f32
    %23 = vector.shape_cast %2 : vector<1x16xf32> to vector<1x16xf32>
    %24 = vector.broadcast %23 : vector<1x16xf32> to vector<16x16xf32>
    %25 = vector.broadcast %cst_9 : f32 to vector<16x16xf32>
    %26 = arith.select %22, %24, %25 : vector<16x16xi1>, vector<16x16xf32>
    %cst_10 = arith.constant 1.000000e+00 : f32
    %27 = vector.broadcast %cst_10 : f32 to vector<16x16xf32>
    %28 = arith.addf %27, %5 : vector<16x16xf32>
    %29 = arith.mulf %26, %28 : vector<16x16xf32>
    %cst_11 = arith.constant dense<0xFF800000> : vector<16xf32>
    %30 = vector.multi_reduction <maximumf>, %29, %cst_11 [0] : vector<16x16xf32> to vector<16xf32>
    %31 = vector.shape_cast %30 : vector<16xf32> to vector<1x16xf32>
    %32 = vector.broadcast %31 : vector<1x16xf32> to vector<16x16xf32>
    %33 = arith.cmpf oeq, %29, %32 : vector<16x16xf32>
    %cst_12 = arith.constant -1.000000e+00 : f32
    %34 = vector.broadcast %cst_12 : f32 to vector<16x16xf32>
    %35 = arith.select %33, %34, %29 : vector<16x16xi1>, vector<16x16xf32>
    %cst_13 = arith.constant dense<0xFF800000> : vector<16xf32>
    %36 = vector.multi_reduction <maximumf>, %35, %cst_13 [0] : vector<16x16xf32> to vector<16xf32>
    %37 = vector.shape_cast %36 : vector<16xf32> to vector<1x16xf32>
    %38 = vector.broadcast %37 : vector<1x16xf32> to vector<16x16xf32>
    %39 = arith.cmpf oeq, %35, %38 : vector<16x16xf32>
    %cst_14 = arith.constant -1.000000e+00 : f32
    %40 = vector.broadcast %cst_14 : f32 to vector<16x16xf32>
    %41 = arith.select %39, %40, %35 : vector<16x16xi1>, vector<16x16xf32>
    %cst_15 = arith.constant dense<0xFF800000> : vector<16xf32>
    %42 = vector.multi_reduction <maximumf>, %41, %cst_15 [0] : vector<16x16xf32> to vector<16xf32>
    %43 = vector.shape_cast %42 : vector<16xf32> to vector<1x16xf32>
    %44 = vector.broadcast %43 : vector<1x16xf32> to vector<16x16xf32>
    %45 = arith.cmpf ogt, %29, %44 : vector<16x16xf32>
    %cst_16 = arith.constant 0.000000e+00 : f32
    %46 = vector.broadcast %cst_16 : f32 to vector<16x16xf32>
    %47 = arith.select %45, %26, %46 : vector<16x16xi1>, vector<16x16xf32>
    %cst_17 = arith.constant dense<0.000000e+00> : vector<16xf32>
    %48 = vector.multi_reduction <add>, %47, %cst_17 [0] : vector<16x16xf32> to vector<16xf32>
    %49 = vector.shape_cast %48 : vector<16xf32> to vector<1x16xf32>
    %cst_18 = arith.constant 0.000000e+00 : f32
    %50 = vector.broadcast %cst_18 : f32 to vector<1x16xf32>
    %51 = arith.cmpf one, %49, %50 : vector<1x16xf32>
    %c15_i32 = arith.constant 15 : i32
    %52 = vector.broadcast %c15_i32 : i32 to vector<1x16xi32>
    %53 = arith.andi %6, %52 : vector<1x16xi32>
    %54 = vector.broadcast %53 : vector<1x16xi32> to vector<16x16xi32>
    %55 = arith.cmpi eq, %54, %7 : vector<16x16xi32>
    %56 = vector.broadcast %51 : vector<1x16xi1> to vector<16x16xi1>
    %57 = arith.andi %55, %56 : vector<16x16xi1>
    %cst_19 = arith.constant 1.000000e+00 : f32
    %58 = vector.broadcast %cst_19 : f32 to vector<16x16xf32>
    %59 = arith.select %57, %58, %47 : vector<16x16xi1>, vector<16x16xf32>
    %60 = arith.mulf %17, %59 : vector<16x16xf32>
    %cst_20 = arith.constant dense<0.000000e+00> : vector<16xf32>
    %61 = vector.multi_reduction <add>, %60, %cst_20 [0] : vector<16x16xf32> to vector<16xf32>
    %62 = vector.shape_cast %61 : vector<16xf32> to vector<1x16xf32>
    %cst_21 = arith.constant 1.000000e+00 : f32
    %63 = vector.broadcast %cst_21 : f32 to vector<1x16xf32>
    %64 = arith.select %51, %62, %63 : vector<1x16xi1>, vector<1x16xf32>
    %65 = arith.subf %18, %0 : vector<1x16xf32>
    %66 = math.log %64 : vector<1x16xf32>
    %67 = arith.addf %65, %66 : vector<1x16xf32>
    %cst_22 = arith.constant 0.000000e+00 : f32
    %68 = vector.broadcast %cst_22 : f32 to vector<1x16xf32>
    %69 = arith.select %51, %67, %68 : vector<1x16xi1>, vector<1x16xf32>
    %70 = tpu.concatenate %59, %69 in 0 : vector<16x16xf32>, vector<1x16xf32> -> vector<17x16xf32>
    %cst_23 = arith.constant dense<0.000000e+00> : vector<17xf32>
    %71 = vector.multi_reduction <add>, %70, %cst_23 [1] : vector<17x16xf32> to vector<17xf32>
    %72 = vector.shape_cast %71 : vector<17xf32> to vector<17x1xf32>
    %73 = vector.extract_strided_slice %72 {offsets = [0, 0], sizes = [16, 1], strides = [1, 1]} : vector<17x1xf32> to vector<16x1xf32>
    %74 = vector.extract_strided_slice %72 {offsets = [16, 0], sizes = [1, 1], strides = [1, 1]} : vector<17x1xf32> to vector<1x1xf32>
    %75 = arith.mulf %73, %3 : vector<16x1xf32>
    %76 = math.absf %75 : vector<16x1xf32>
    %cst_24 = arith.constant dense<0.000000e+00> : vector<1xf32>
    %77 = vector.multi_reduction <add>, %76, %cst_24 [0] : vector<16x1xf32> to vector<1xf32>
    %78 = vector.shape_cast %77 : vector<1xf32> to vector<1x1xf32>
    %cst_25 = arith.constant 5.000000e-02 : f32
    %79 = vector.broadcast %cst_25 : f32 to vector<1x1xf32>
    %80 = arith.mulf %79, %78 : vector<1x1xf32>
    %81 = arith.addf %74, %80 : vector<1x1xf32>
    %c0_26 = arith.constant 0 : index
    %c0_27 = arith.constant 0 : index
    %82 = vector.load %arg3[%c0_26, %c0_27] : memref<1x1xf32, #tpu.memory_space<vmem>>, vector<1x1xf32>
    tpu.vector_store %arg3[%c0_26, %c0_27], %81 {strides = array<i32>} : memref<1x1xf32, #tpu.memory_space<vmem>>, vector<1x1xf32>,
    return
  }
}

</mosaic_0001>

<llo_original>
// kernel: cox_sgd_loss.1
$region0: #{cox_sgd_loss.1}
  #allocation0 [shape = 'u32[]', space=smem, size = 0x4, offset = 0x4, fixed_abs, tag = 'smem constant byte address 0x4 - core index']
  #allocation1 [shape = 'u32[144,128]{1,0:T(1,128)}', space=vmem, size = 0x12000, scoped, tag = 'internal scratch']
  %s0 = inlined_call_operand.vmem [shape: f32[3,16], index: 0, kind: input, shape index: {}]
  %s1 = inlined_call_operand.vmem [shape: f32[32,1], index: 1, kind: input, shape index: {}]
  %s2 = inlined_call_operand.vmem [shape: f32[16,16], index: 2, kind: input, shape index: {}]
  %s3 = inlined_call_operand.hbm [shape: f32[1,1], index: 3, kind: output, shape index: {}]
  %s4 = sld [smem:[#allocation0]]
  $region22: #{cox_sgd_loss.1} parent=0
    _
  %s6 = ssub.s32 1, %s4
  %s7 = scalar_select 0, %s6, %s4
  $region1: #{cox_sgd_loss.1} parent=0
    #allocation2 [shape = 'u8[512]{0}', space=vmem, size = 0x400, scoped, tag = 'output window, operand 0, single buffered']
    #allocation3 [shape = 's32[1]{0}', space=sflag, size = 0x4, scoped, tag = 'scoped memory for cox_sgd_loss.1']
    %8 = vsyncpa [#allocation3], 0
    // Predicated region
    $region2: #{cox_sgd_loss.1} parent=1 // pred_check
      _
    $region3: #{cox_sgd_loss.1} parent=1 // pred_check_branch
      %10 = sbr.rel (0) target = $region5
    $region4: #{cox_sgd_loss.1} parent=1 // pred_region
      _
    $region5: #{cox_sgd_loss.1} parent=1 // pred_fallthru
      _
    // Predicated region
    $region6: #{cox_sgd_loss.1} parent=1 // pred_check
      _
    $region7: #{cox_sgd_loss.1} parent=1 // pred_check_branch
      %12 = sbr.rel (0) target = $region9
    $region8: #{cox_sgd_loss.1} parent=1 // pred_region
      _
    $region9: #{cox_sgd_loss.1} parent=1 // pred_fallthru
      _
    // Predicated region
    $region10: #{cox_sgd_loss.1} parent=1 // pred_check
      _
    $region11: #{cox_sgd_loss.1} parent=1 // pred_check_branch
      %14 = sbr.rel (0) target = $region13
    $region12: #{cox_sgd_loss.1} parent=1 // pred_region
      _
    $region13: #{cox_sgd_loss.1} parent=1 // pred_fallthru
      _
    %v15 = vld [vmem:[%s0] sm:$0x1]
    %v16 = vld [vmem:[%s0 + $0x1] sm:$0x1]
    %v17 = vld [vmem:[%s0 + $0x2] sm:$0x1]
    %v18 = vld [vmem:[%s1] sm:$0xff]
    %v19 = vld [vmem:[%s1 + $0x8] sm:$0xff]
    %v20 = vld [vmem:[%s1 + $0x10] sm:$0xff]
    %v21 = vld [vmem:[%s1 + $0x18] sm:$0xff]
    %v22 = vld [vmem:[%s2] sm:$0xff]
    %v23 = vld [vmem:[%s2 + $0x8] sm:$0xff]
    %v24 = vlaneseq
    %v25 = vand.u32 %v24, 127
    %v26 = vlaneseq
    %v27 = vshrl.u32 %v26, 7
    %v28 = vadd.s32 %v27, 8
    %vm29 = vcmask 7168
    %v30 = vsel %vm29, %v18, -inf
    %v31 = vsel %vm29, %v19, -inf
    %v32 = vmax.f32 %v30, %v31
    %v33 = vrot.slane %v32, 4
    %v34 = vmax.f32 %v32, %v33
    %v35 = vrot.slane %v34, 2
    %v36 = vmax.f32 %v34, %v35
    %v37 = vrot.slane %v36, 1
    %v38 = vmax.f32 %v36, %v37
    %v39 = vsub.f32 %v18, %v38
    %v40 = vsub.f32 %v19, %v38
    %v41 = vmul.f32 %v39, 1.442695
    %v42 = vpow.pop %v41
    %v43 = vmul.f32 %v40, 1.442695
    %v44 = vpow.pop %v43
    %46 = vset.pattern.permute.xlu0 0
    %47 = vperm.xlu0 %46, %v20
    %v48 = vpop.permute.xlu0 %47
    %51 = vset.pattern.permute.xlu0 0
    %52 = vperm.xlu0 %51, %v21
    %v53 = vpop.permute.xlu0 %52
    %56 = vset.pattern.permute.xlu0 0
    %57 = vperm.xlu0 %56, %v42
    %v58 = vpop.permute.xlu0 %57
    %61 = vset.pattern.permute.xlu0 0
    %62 = vperm.xlu0 %61, %v44
    %v63 = vpop.permute.xlu0 %62
    %66 = vset.pattern.permute.xlu0 0
    %67 = vperm.xlu0 %66, %v38
    %v68 = vpop.permute.xlu0 %67
    %v70 = vlaneseq
    %v71 = vshrl.u32 %v70, 7
    %v72 = vsub.s32 0, %v71
    %v73 = vrot.slane %v16, %v72
    %v74 = vsub.f32 %v48, %v73
    %v75 = vsub.f32 %v53, %v73
    %vm76 = vcmp.gt.f32.partialorder %v74, 0.0
    %vm77 = vcmp.gt.f32.partialorder %v75, 0.0
    %v78 = vlaneseq
    %v79 = vshrl.u32 %v78, 7
    %v80 = vsub.s32 0, %v79
    %v81 = vrot.slane %v17, %v80
    %v82 = vsel %vm76, %v81, 0.0
    %v83 = vsel %vm77, %v81, 0.0
    %v84 = vadd.f32 %v22, 1.0
    %v85 = vadd.f32 %v23, 1.0
    %v86 = vmul.f32 %v82, %v84
    %v87 = vmul.f32 %v83, %v85
    %vm88 = vcmask 130048
    %v89 = vsel %vm88, %v86, -inf
    %v90 = vsel %vm88, %v87, -inf
    %v91 = vmax.f32 %v89, %v90
    %v92 = vrot.slane %v91, 4
    %v93 = vmax.f32 %v91, %v92
    %v94 = vrot.slane %v93, 2
    %v95 = vmax.f32 %v93, %v94
    %v96 = vrot.slane %v95, 1
    %v97 = vmax.f32 %v95, %v96
    %vm98 = vcmp.eq.f32.partialorder %v86, %v97
    %vm99 = vcmp.eq.f32.partialorder %v87, %v97
    %v100 = vsel %vm98, -1.0, %v86
    %v101 = vsel %vm99, -1.0, %v87
    %v102 = vsel %vm88, %v100, -inf
    %v103 = vsel %vm88, %v101, -inf
    %v104 = vmax.f32 %v102, %v103
    %v105 = vrot.slane %v104, 4
    %v106 = vmax.f32 %v104, %v105
    %v107 = vrot.slane %v106, 2
    %v108 = vmax.f32 %v106, %v107
    %v109 = vrot.slane %v108, 1
    %v110 = vmax.f32 %v108, %v109
    %vm111 = vcmp.eq.f32.partialorder %v100, %v110
    %vm112 = vcmp.eq.f32.partialorder %v101, %v110
    %v113 = vsel %vm111, -1.0, %v100
    %v114 = vsel %vm112, -1.0, %v101
    %v115 = vsel %vm88, %v113, -inf
    %v116 = vsel %vm88, %v114, -inf
    %v117 = vmax.f32 %v115, %v116
    %v118 = vrot.slane %v117, 4
    %v119 = vmax.f32 %v117, %v118
    %v120 = vrot.slane %v119, 2
    %v121 = vmax.f32 %v119, %v120
    %v122 = vrot.slane %v121, 1
    %v123 = vmax.f32 %v121, %v122
    %vm124 = vcmp.gt.f32.partialorder %v86, %v123
    %vm125 = vcmp.gt.f32.partialorder %v87, %v123
    %v126 = vsel %vm124, %v82, 0.0
    %v127 = vsel %vm125, %v83, 0.0
    %v128 = vsel %vm88, %v126, 0.0
    %v129 = vsel %vm88, %v127, 0.0
    %v130 = vadd.f32 %v128, %v129
    %v131 = vrot.slane %v130, 4
    %v132 = vadd.f32 %v130, %v131
    %v133 = vrot.slane %v132, 2
    %v134 = vadd.f32 %v132, %v133
    %v135 = vrot.slane %v134, 1
    %v136 = vadd.f32 %v134, %v135
    %vm137 = vcmp.ne.f32.partialorder %v136, 0.0
    %v138 = vand.u32 %v25, 15
    %vm139 = vcmp.eq.s32.totalorder %v138, %v27
    %vm140 = vcmp.eq.s32.totalorder %v138, %v28
    %v141 = vsel %vm137, 1, 0
    %vm142 = vcmp.eq.s32.totalorder %v141, 1
    %vm143 = vmand %vm139, %vm142
    %vm144 = vmand %vm140, %vm142
    %v145 = vsel %vm143, 1.0, %v126
    %v146 = vsel %vm144, 1.0, %v127
    %v147 = vmul.f32 %v58, %v145
    %v148 = vmul.f32 %v63, %v146
    %v149 = vsel %vm88, %v147, 0.0
    %v150 = vsel %vm88, %v148, 0.0
    %v151 = vadd.f32 %v149, %v150
    %v152 = vrot.slane %v151, 4
    %v153 = vadd.f32 %v151, %v152
    %v154 = vrot.slane %v153, 2
    %v155 = vadd.f32 %v153, %v154
    %v156 = vrot.slane %v155, 1
    %v157 = vadd.f32 %v155, %v156
    %v158 = vsel %vm137, %v157, 1.0
    %v159 = vsub.f32 %v68, %v15
    %v160 = vlog2.pop %v158
    %v161 = vmul.f32 %v160, 0.6931472
    %v162 = vadd.f32 %v159, %v161
    %v163 = vsel %vm137, %v162, 0.0
    %v164 = vsel %vm88, %v145, 0.0
    %165 = vadd.xlane.f32.xlu0 %v164
    %v166 = vpop.xlane.xlu0 %165
    %v167 = vsel %vm88, %v146, 0.0
    %168 = vadd.xlane.f32.xlu0 %v167
    %v169 = vpop.xlane.xlu0 %168
    %vm170 = vcmask 122880
    %v171 = vsel %vm170, %v163, 0.0
    %172 = vadd.xlane.f32.xlu0 %v171
    %v173 = vpop.xlane.xlu0 %172
    %v174 = vmul.f32 %v166, %v18
    %v175 = vmul.f32 %v169, %v19
    %v176 = vand.u32 2147483647, %v174
    %v177 = vand.u32 2147483647, %v175
    %v178 = vsel %vm29, %v176, 0.0
    %v179 = vsel %vm29, %v177, 0.0
    %v180 = vadd.f32 %v178, %v179
    %v181 = vrot.slane %v180, 4
    %v182 = vadd.f32 %v180, %v181
    %v183 = vrot.slane %v182, 2
    %v184 = vadd.f32 %v182, %v183
    %v185 = vrot.slane %v184, 1
    %v186 = vadd.f32 %v184, %v185
    %v187 = vmul.f32 %v186, 0.05
    %v188 = vadd.f32 %v173, %v187
    %vm189 = vcmask 0
    %190 = vst.msk [vmem:[#allocation2] sm:$0x1] %vm189, %v188
    // Predicated region
    $region14: #{cox_sgd_loss.1} parent=1 // pred_check
      _
    $region15: #{cox_sgd_loss.1} parent=1 // pred_check_branch
      %192 = sbr.rel (0) target = $region17
    $region16: #{cox_sgd_loss.1} parent=1 // pred_region
      %s194 = ssub.s32 16, 16
      %195 = vsyncadd [#allocation3], %s194
      %s197 = sshll.u32 [#allocation2], 4
      %s198 = int_to_ptr.vmem [resolvable:$true] %s197
      %200 = dma.vmem_to_hbm [thread:$0]  %s198, 16, %s3, [#allocation3]
    $region17: #{cox_sgd_loss.1} parent=1 // pred_fallthru
      _
    // Predicated region
    $region18: #{cox_sgd_loss.1} parent=1 // pred_check
      _
    $region19: #{cox_sgd_loss.1} parent=1 // pred_check_branch
      %202 = sbr.rel (0) target = $region21
    $region20: #{cox_sgd_loss.1} parent=1 // pred_region
      %203 = dma.done [#allocation3], 16
    $region21: #{cox_sgd_loss.1} parent=1 // pred_fallthru
      _
    %204 = vsyncpa [#allocation3], 1

</llo_original>
